<compile_context>
chip_gen: v6e
topology: v6e:2x2x1
jax: 0.10.0
libtpu: 0.0.40
codegen_flags: <defaults>
</compile_context>

<pallas_src>
import functools

import jax
import jax.numpy as jnp
from jax import lax
from jax.experimental import pallas as pl
from jax.experimental.pallas import tpu as pltpu

_LANES = 128
_SUBLANES = 8
_CHUNK_ROWS = 256          # rows per in-kernel accumulation chunk (multiple of 8)

# Sentinel padding: max(x,0) - x*y = 200 - 200 = 0 and exp(-200) underflows to exactly
# 0.0 in f32 (log1p(0) = 0), so padded elements contribute exactly zero loss.
_SENT_X = 200.0
_SENT_Y = 1.0


def _bce_elementwise_f32(x, y):
    """Numerically-stable BCE-with-logits (PyTorch's formulation), computed in f32."""
    x = x.astype(jnp.float32)
    y = y.astype(jnp.float32)
    # TODO(synk): if the v7x-bf16 path turns out EUP-bound, compute the exp/log1p term
    # in bf16 there; kept f32 everywhere until verified in a bundle dump.
    return jnp.maximum(x, 0.0) - x * y + jnp.log1p(jnp.exp(-jnp.abs(x)))


def _block_budget_bytes() -> int:
    """Per-input HBM block budget, generation aware (v7x has only 64 MiB VMEM)."""
    try:
        vmem = int(getattr(pltpu.get_tpu_info(), "vmem_capacity_bytes", 0))
    except Exception:  # not on TPU / API mismatch -> conservative default
        vmem = 0
    if vmem >= 100 * 1024 * 1024:      # v5e / v6e: 128 MiB VMEM
        return 8 * 1024 * 1024
    return 6 * 1024 * 1024             # v7x (64 MiB VMEM) or unknown


def _bce_block_kernel(x_ref, y_ref, o_ref, *, chunk_rows, num_chunks):
    """Reduce one fully-valid (tile_rows, 128) block to one (8, 128) f32 partial sum.

    Chunked accumulation keeps f32 intermediates at ~chunk_rows*128 elements regardless
    of block size; the per-chunk reduction over the leading axis is pure VPU adds.  The
    single cross-lane/sublane reduction happens once, on a tiny array, outside the kernel.
    """
    def reduce_chunk(x, y):
        loss = _bce_elementwise_f32(x, y)
        return loss.reshape(-1, _SUBLANES, _LANES).sum(axis=0)

    if num_chunks == 1:
        o_ref[...] = reduce_chunk(x_ref[...], y_ref[...])
    else:
        def body(c, acc):
            r0 = pl.multiple_of(c * chunk_rows, chunk_rows)
            return acc + reduce_chunk(x_ref[pl.ds(r0, chunk_rows), :],
                                      y_ref[pl.ds(r0, chunk_rows), :])

        o_ref[...] = lax.fori_loop(
            0, num_chunks, body, jnp.zeros((_SUBLANES, _LANES), jnp.float32))


def bce_with_logits_loss(logits: jax.Array, targets: jax.Array) -> jax.Array:
    """Equivalent of nn.BCEWithLogitsLoss()(logits, targets) (mean reduction).

    Accepts any shape / dtype (e.g. bf16); all math is done in f32.
    """
    assert logits.shape == targets.shape, "input/target must have the same shape"
    xf = logits.reshape(-1)
    yf = targets.reshape(-1)
    m = xf.size
    assert m > 0, "empty input"

    rem = m % _LANES
    rows = m // _LANES + (1 if rem else 0)

    if rem:
        # Only non-128-aligned element counts pay this single copy; sentinel values
        # contribute exactly zero loss, so no masking is needed anywhere.
        pad = rows * _LANES - m
        xf = jnp.pad(xf, (0, pad), constant_values=_SENT_X)
        yf = jnp.pad(yf, (0, pad), constant_values=_SENT_Y)

    rows8 = (rows // _SUBLANES) * _SUBLANES
    if rows8 < _SUBLANES:
        # Tiny input (< 1024 elements): a kernel launch is pure overhead.
        return jnp.sum(_bce_elementwise_f32(xf, yf)) / jnp.float32(m)

    x2 = xf.reshape(rows, _LANES)   # free: contiguous row-major reshape
    y2 = yf.reshape(rows, _LANES)

    # ---- static tiling decisions ------------------------------------------------
    itemsize = max(jnp.dtype(x2.dtype).itemsize, jnp.dtype(y2.dtype).itemsize)
    budget_rows = max(
        _SUBLANES,
        (_block_budget_bytes() // (_LANES * itemsize)) // _SUBLANES * _SUBLANES,
    )

    # Balanced full blocks; at least two so the "parallel" axis feeds both v7x cores.
    num_blocks = (rows8 + budget_rows - 1) // budget_rows
    if num_blocks == 1 and rows8 >= 2 * _SUBLANES:
        num_blocks = 2
    tile_rows = (rows8 // num_blocks) // _SUBLANES * _SUBLANES
    if tile_rows >= _CHUNK_ROWS:
        tile_rows = (tile_rows // _CHUNK_ROWS) * _CHUNK_ROWS
    chunk_rows = min(tile_rows, _CHUNK_ROWS)
    num_chunks = tile_rows // chunk_rows
    rows_kernel = num_blocks * tile_rows          # rows handled by the Pallas kernel

    block_in_bytes = tile_rows * _LANES * itemsize
    # 2 inputs x 2 pipeline buffers x block + margin for chunk temps / outputs.
    vmem_limit = max(16 * 1024 * 1024,
                     min(56 * 1024 * 1024, 4 * block_in_bytes + 8 * 1024 * 1024))

    kernel = functools.partial(
        _bce_block_kernel, chunk_rows=chunk_rows, num_chunks=num_chunks)

    cost = pl.CostEstimate(
        flops=6 * rows_kernel * _LANES,
        transcendentals=2 * rows_kernel * _LANES,
        bytes_accessed=2 * rows_kernel * _LANES * itemsize
        + num_blocks * _SUBLANES * _LANES * 4,
    )

    partials = pl.pallas_call(
        kernel,
        out_shape=jax.ShapeDtypeStruct((num_blocks * _SUBLANES, _LANES), jnp.float32),
        grid_spec=pltpu.PrefetchScalarGridSpec(
            num_scalar_prefetch=0,
            grid=(num_blocks,),
            in_specs=[
                pl.BlockSpec((tile_rows, _LANES), lambda i: (i, 0)),
                pl.BlockSpec((tile_rows, _LANES), lambda i: (i, 0)),
            ],
            out_specs=pl.BlockSpec((_SUBLANES, _LANES), lambda i: (i, 0)),
        ),
        compiler_params=pltpu.CompilerParams(
            dimension_semantics=("parallel",),   # independent blocks -> megacore OK
            vmem_limit_bytes=vmem_limit,
        ),
        cost_estimate=cost,
    )(x2, y2)

    total = jnp.sum(partials)

    # Leftover rows (< one block; includes the sentinel-padded row, if any) in plain JAX.
    if rows_kernel < rows:
        total = total + jnp.sum(
            _bce_elementwise_f32(x2[rows_kernel:], y2[rows_kernel:]))

    return total / jnp.float32(m)


if __name__ == "__main__":
    key = jax.random.PRNGKey(0)
    k_logits, k_labels = jax.random.split(key)

    def ref_loss(x, y):
        x = x.astype(jnp.float32)
        y = y.astype(jnp.float32)
        return jnp.mean(jnp.maximum(x, 0.0) - x * y + jnp.log1p(jnp.exp(-jnp.abs(x))))

    # (batch, num_labels) as implied by the intent/label classification module.
    B, N = 16, 128
    logits = jax.random.normal(k_logits, (B, N), dtype=jnp.float32)
    targets = jax.random.bernoulli(k_labels, p=0.5, shape=(B, N)).astype(jnp.float32)
    loss = jax.block_until_ready(bce_with_logits_loss(logits, targets))
    ref = ref_loss(logits, targets)
    assert jnp.allclose(loss, ref, rtol=1e-5, atol=1e-6), (loss, ref)

    # Ragged shape: exercises sentinel padding + JAX-side tail + kernel path.
    B2, N2 = 33, 77
    logits2 = jax.random.normal(k_logits, (B2, N2), dtype=jnp.float32)
    targets2 = jax.random.bernoulli(k_labels, p=0.5, shape=(B2, N2)).astype(jnp.float32)
    loss2 = jax.block_until_ready(bce_with_logits_loss(logits2, targets2))
    ref2 = ref_loss(logits2, targets2)
    assert jnp.allclose(loss2, ref2, rtol=1e-5, atol=1e-6), (loss2, ref2)

    # Moderate size: exercises the multi-chunk in-kernel accumulation (num_chunks > 1).
    B3, N3 = 1024, 256
    logits3 = jax.random.normal(k_logits, (B3, N3), dtype=jnp.float32)
    targets3 = jax.random.bernoulli(k_labels, p=0.5, shape=(B3, N3)).astype(jnp.float32)
    loss3 = jax.block_until_ready(bce_with_logits_loss(logits3, targets3))
    ref3 = ref_loss(logits3, targets3)
    assert jnp.allclose(loss3, ref3, rtol=1e-4, atol=1e-5), (loss3, ref3)

    # bf16 inputs (half the HBM traffic; f32 math inside the kernel).
    loss_bf16 = jax.block_until_ready(
        bce_with_logits_loss(logits.astype(jnp.bfloat16), targets.astype(jnp.bfloat16)))
    assert jnp.allclose(loss_bf16, ref, rtol=2e-2, atol=2e-2), (loss_bf16, ref)

    print("KERNEL_OK")
</pallas_src>

<mosaic_0001>
module attributes {stable_mosaic.version = 11 : i64} {
  func.func @_bce_block_kernel(%arg0: i32, %arg1: memref<8x128xf32, #tpu.memory_space<vmem>>, %arg2: memref<8x128xf32, #tpu.memory_space<vmem>>, %arg3: memref<8x128xf32, #tpu.memory_space<vmem>>) attributes {dimension_semantics = [#tpu.dimension_semantics<parallel>], iteration_bounds = array<i64: 2>, scalar_prefetch = 0 : i64, scratch_operands = 0 : i64, tpu.core_type = #tpu.core_type<tc>, window_params = [{transform_indices = @transform_0, window_bounds = array<i64: 8, 128>}, {transform_indices = @transform_1, window_bounds = array<i64: 8, 128>}, {transform_indices = @transform_2, window_bounds = array<i64: 8, 128>}]} {
    %c0 = arith.constant 0 : index
    %c0_0 = arith.constant 0 : index
    %0 = vector.load %arg1[%c0, %c0_0] : memref<8x128xf32, #tpu.memory_space<vmem>>, vector<8x128xf32>
    %c0_1 = arith.constant 0 : index
    %c0_2 = arith.constant 0 : index
    %1 = vector.load %arg2[%c0_1, %c0_2] : memref<8x128xf32, #tpu.memory_space<vmem>>, vector<8x128xf32>
    %cst = arith.constant 0.000000e+00 : f32
    %2 = vector.broadcast %cst : f32 to vector<8x128xf32>
    %3 = arith.maximumf %0, %2 : vector<8x128xf32>
    %4 = arith.mulf %0, %1 : vector<8x128xf32>
    %5 = arith.subf %3, %4 : vector<8x128xf32>
    %6 = math.absf %0 : vector<8x128xf32>
    %cst_3 = arith.constant 0.000000e+00 : f32
    %7 = vector.broadcast %cst_3 : f32 to vector<8x128xf32>
    %8 = arith.subf %7, %6 : vector<8x128xf32>
    %9 = math.exp %8 : vector<8x128xf32>
    %10 = math.log1p %9 : vector<8x128xf32>
    %11 = arith.addf %5, %10 : vector<8x128xf32>
    %12 = vector.shape_cast %11 : vector<8x128xf32> to vector<1x8x128xf32>
    %cst_4 = arith.constant dense<0.000000e+00> : vector<8x128xf32>
    %13 = vector.multi_reduction <add>, %12, %cst_4 [0] : vector<1x8x128xf32> to vector<8x128xf32>
    %c0_5 = arith.constant 0 : index
    %c0_6 = arith.constant 0 : index
    %14 = vector.load %arg3[%c0_5, %c0_6] : memref<8x128xf32, #tpu.memory_space<vmem>>, vector<8x128xf32>
    tpu.vector_store %arg3[%c0_5, %c0_6], %13 {strides = array<i32>} : memref<8x128xf32, #tpu.memory_space<vmem>>, vector<8x128xf32>,
    return
  }
  func.func @transform_0(%arg0: i32) -> (i32, i32) {
    %c0_i32 = arith.constant 0 : i32
    %c0_i32_0 = arith.constant 0 : i32
    return %arg0, %c0_i32 : i32, i32
  }
  func.func @transform_1(%arg0: i32) -> (i32, i32) {
    %c0_i32 = arith.constant 0 : i32
    %c0_i32_0 = arith.constant 0 : i32
    return %arg0, %c0_i32 : i32, i32
  }
  func.func @transform_2(%arg0: i32) -> (i32, i32) {
    %c0_i32 = arith.constant 0 : i32
    %c0_i32_0 = arith.constant 0 : i32
    return %arg0, %c0_i32 : i32, i32
  }
}

</mosaic_0001>

<llo_original>
// kernel: tpu_custom_call.1
$region0: #{tpu_custom_call.1}
  #allocation0 [shape = 'u32[]', space=smem, size = 0x4, offset = 0x4, fixed_abs, tag = 'smem constant byte address 0x4 - core index']
  #allocation1 [shape = 'u32[144,128]{1,0:T(1,128)}', space=vmem, size = 0x12000, scoped, tag = 'internal scratch']
  %s0 = inlined_call_operand.hbm [shape: f32[16,128], index: 0, kind: input, shape index: {}]
  %s1 = inlined_call_operand.hbm [shape: f32[16,128], index: 1, kind: input, shape index: {}]
  %s2 = inlined_call_operand.hbm [shape: f32[16,128], index: 2, kind: output, shape index: {}]
  %s3 = sld [smem:[#allocation0]]
  $region49: #{tpu_custom_call.1} parent=0
    _
  %s5 = ssub.s32 1, %s3
  %s6 = scalar_select 0, %s5, %s3
  $region1: #{tpu_custom_call.1} parent=0
    #allocation2 [shape = 'u8[8192]{0}', space=vmem, size = 0x2000, scoped, tag = 'input window, operand 0']
    #allocation3 [shape = 's32[2]{0}', space=sflag, size = 0x8, scoped, tag = 'scoped memory for tpu_custom_call.1']
    #allocation4 [shape = 's32[2]{0}', space=sflag, size = 0x8, scoped, tag = 'scoped memory for tpu_custom_call.1']
    #allocation5 [shape = 'u8[8192]{0}', space=vmem, size = 0x2000, scoped, tag = 'input window, operand 1']
    #allocation6 [shape = 's32[2]{0}', space=sflag, size = 0x8, scoped, tag = 'scoped memory for tpu_custom_call.1']
    #allocation7 [shape = 'u8[8192]{0}', space=vmem, size = 0x2000, scoped, tag = 'output window, operand 0']
    %7 = vsyncpa [#allocation3], 0
    %s8 = scalar_lea.sflag [#allocation3], 1
    %9 = vsyncpa %s8, 0
    %10 = vsyncpa [#allocation6], 0
    %s11 = scalar_lea.sflag [#allocation6], 1
    %12 = vsyncpa %s11, 0
    %13 = vsyncpa [#allocation4], 0
    %s14 = scalar_lea.sflag [#allocation4], 1
    %15 = vsyncpa %s14, 0
    loop: start=0, step=1, limit=4
    $region2: #{tpu_custom_call.1} parent=1 // loop_pre_header
      _
    $region3: #{tpu_custom_call.1} parent=1 // loop_header
      %s17 = sphi 0, %s21
      %p18 = scmp.ge.s32.totalorder %s17, 4
      %s27 = sphi 0, %s29
      %s30 = sphi 0, %s27
      %s31 = sphi 0, %s30
      %s47 = sphi 0, %s31
      %s53 = sphi 0, %s55
      %s56 = sphi 0, %s53
      %s57 = sphi 0, %s56
      %s73 = sphi 0, %s57
      %s79 = sphi 0, %s81
      %s82 = sphi 0, %s79
      %s83 = sphi 0, %s82
      %s99 = sphi 0, %s83
    $region4: #{tpu_custom_call.1} parent=1 // loop_header_branch
      %20 = sbr.rel (%p18) target = $region8
    $region5: #{tpu_custom_call.1} parent=1 // loop_body
      %s22 = ssub.s32 %s17, 1
      %s23 = ssub.s32 %s17, 2
      %s24 = sadd.s32 %s17, 1
      %s25 = ssub.s32 %s17, %s24
      %p26 = scmp.eq.s32.totalorder %s25, 0
      %s28 = sadd.s32 %s27, 1
      %s29 = scalar_select %p26, %s27, %s28
      %p32 = pneg %p26
      %p33 = scmp.eq.s32.totalorder %s17, 1
      %p34 = por %p32, %p33
      %p35 = scmp.ne.s32.totalorder %s27, %s30
      %p36 = scmp.eq.s32.totalorder %s17, 0
      %p37 = por %p35, %p36
      %p38 = scmp.ne.s32.totalorder %s27, %s30
      %p39 = scmp.eq.s32.totalorder %s22, 1
      %p40 = por %p38, %p39
      %p41 = scmp.ne.s32.totalorder %s30, %s31
      %p42 = scmp.eq.s32.totalorder %s22, 0
      %p43 = por %p41, %p42
      %p44 = scmp.ne.s32.totalorder %s30, %s31
      %p45 = scmp.eq.s32.totalorder %s23, 1
      %p46 = por %p44, %p45
      %p48 = scmp.ne.s32.totalorder %s31, %s47
      %p49 = scmp.eq.s32.totalorder %s23, 0
      %p50 = por %p48, %p49
      %s51 = ssub.s32 %s17, %s24
      %p52 = scmp.eq.s32.totalorder %s51, 0
      %s54 = sadd.s32 %s53, 1
      %s55 = scalar_select %p52, %s53, %s54
      %p58 = pneg %p52
      %p59 = scmp.eq.s32.totalorder %s17, 1
      %p60 = por %p58, %p59
      %p61 = scmp.ne.s32.totalorder %s53, %s56
      %p62 = scmp.eq.s32.totalorder %s17, 0
      %p63 = por %p61, %p62
      %p64 = scmp.ne.s32.totalorder %s53, %s56
      %p65 = scmp.eq.s32.totalorder %s22, 1
      %p66 = por %p64, %p65
      %p67 = scmp.ne.s32.totalorder %s56, %s57
      %p68 = scmp.eq.s32.totalorder %s22, 0
      %p69 = por %p67, %p68
      %p70 = scmp.ne.s32.totalorder %s56, %s57
      %p71 = scmp.eq.s32.totalorder %s23, 1
      %p72 = por %p70, %p71
      %p74 = scmp.ne.s32.totalorder %s57, %s73
      %p75 = scmp.eq.s32.totalorder %s23, 0
      %p76 = por %p74, %p75
      %s77 = ssub.s32 %s17, %s24
      %p78 = scmp.eq.s32.totalorder %s77, 0
      %s80 = sadd.s32 %s79, 1
      %s81 = scalar_select %p78, %s79, %s80
      %p84 = pneg %p78
      %p85 = scmp.eq.s32.totalorder %s17, 1
      %p86 = por %p84, %p85
      %p87 = scmp.ne.s32.totalorder %s79, %s82
      %p88 = scmp.eq.s32.totalorder %s17, 0
      %p89 = por %p87, %p88
      %p90 = scmp.ne.s32.totalorder %s79, %s82
      %p91 = scmp.eq.s32.totalorder %s22, 1
      %p92 = por %p90, %p91
      %p93 = scmp.ne.s32.totalorder %s82, %s83
      %p94 = scmp.eq.s32.totalorder %s22, 0
      %p95 = por %p93, %p94
      %p96 = scmp.ne.s32.totalorder %s82, %s83
      %p97 = scmp.eq.s32.totalorder %s23, 1
      %p98 = por %p96, %p97
      %p100 = scmp.ne.s32.totalorder %s83, %s99
      %p101 = scmp.eq.s32.totalorder %s23, 0
      %p102 = por %p100, %p101
      %p103 = scmp.le.s32.totalorder 1, %s17
      %p104 = scmp.lt.s32.totalorder %s17, 3
      %p105 = pnand %p103, %p104
      %p106 = pneg %p105
      // Predicated region
      $region9: #{tpu_custom_call.1} parent=5 // pred_check
        _
      $region10: #{tpu_custom_call.1} parent=5 // pred_check_branch
        %108 = sbr.rel (%p105) target = $region12
      $region11: #{tpu_custom_call.1} parent=5 // pred_region
        %s109 = ssub.s32 %s17, 1
      $region12: #{tpu_custom_call.1} parent=5 // pred_fallthru
        _
      %p110 = scmp.lt.s32.totalorder %s17, 2
      // Predicated region
      $region13: #{tpu_custom_call.1} parent=5 // pred_check
        %p111 = pneg %p110
      $region14: #{tpu_custom_call.1} parent=5 // pred_check_branch
        %113 = sbr.rel (%p111) target = $region16
      $region15: #{tpu_custom_call.1} parent=5 // pred_region
        // Predicated region
        $region17: #{tpu_custom_call.1} parent=15 // pred_check
          %p114 = pneg %p37
        $region18: #{tpu_custom_call.1} parent=15 // pred_check_branch
          %116 = sbr.rel (%p114) target = $region20
        $region19: #{tpu_custom_call.1} parent=15 // pred_region
          %s117 = sand.u32 %s27, 1
          %s118 = scalar_lea.sflag [#allocation3], %s117
          %s119 = sand.u32 %s27, 1
          %s120 = smul.addr %s119, 8
          %s121 = scalar_lea.vmem [#allocation2], %s120
          %s123 = ssub.s32 128, 128
          %124 = vsyncadd %s118, %s123
          %s125 = smul.addr %s17, 128
          %s126 = scalar_lea.hbm %s0, %s125
          %s128 = sshll.u32 %s121, 4
          %s129 = int_to_ptr.vmem [resolvable:$true] %s128
          %131 = dma.hbm_to_vmem [thread:$0]  %s126, 128, %s129, %s118
        $region20: #{tpu_custom_call.1} parent=15 // pred_fallthru
          _
        // Predicated region
        $region21: #{tpu_custom_call.1} parent=15 // pred_check
          %p132 = pneg %p63
        $region22: #{tpu_custom_call.1} parent=15 // pred_check_branch
          %134 = sbr.rel (%p132) target = $region24
        $region23: #{tpu_custom_call.1} parent=15 // pred_region
          %s135 = sand.u32 %s53, 1
          %s136 = scalar_lea.sflag [#allocation6], %s135
          %s137 = sand.u32 %s53, 1
          %s138 = smul.addr %s137, 8
          %s139 = scalar_lea.vmem [#allocation5], %s138
          %s141 = ssub.s32 128, 128
          %142 = vsyncadd %s136, %s141
          %s143 = smul.addr %s17, 128
          %s144 = scalar_lea.hbm %s1, %s143
          %s146 = sshll.u32 %s139, 4
          %s147 = int_to_ptr.vmem [resolvable:$true] %s146
          %149 = dma.hbm_to_vmem [thread:$0]  %s144, 128, %s147, %s136
        $region24: #{tpu_custom_call.1} parent=15 // pred_fallthru
          _
      $region16: #{tpu_custom_call.1} parent=5 // pred_fallthru
        _
      %p150 = scmp.le.s32.totalorder 1, %s17
      %p151 = scmp.lt.s32.totalorder %s17, 3
      %p152 = pnand %p150, %p151
      %p153 = pneg %p152
      // Predicated region
      $region25: #{tpu_custom_call.1} parent=5 // pred_check
        _
      $region26: #{tpu_custom_call.1} parent=5 // pred_check_branch
        %155 = sbr.rel (%p152) target = $region28
      $region27: #{tpu_custom_call.1} parent=5 // pred_region
        %s156 = ssub.s32 %s17, 1
        %s157 = sand.u32 %s30, 1
        %s158 = scalar_lea.sflag [#allocation3], %s157
        %s159 = sand.u32 %s30, 1
        %s160 = smul.addr %s159, 8
        %s161 = scalar_lea.vmem [#allocation2], %s160
        // Predicated region
        $region29: #{tpu_custom_call.1} parent=27 // pred_check
          %p162 = pneg %p43
        $region30: #{tpu_custom_call.1} parent=27 // pred_check_branch
          %164 = sbr.rel (%p162) target = $region32
        $region31: #{tpu_custom_call.1} parent=27 // pred_region
          %165 = dma.done %s158, 128
        $region32: #{tpu_custom_call.1} parent=27 // pred_fallthru
          _
        %s166 = sand.u32 %s56, 1
        %s167 = scalar_lea.sflag [#allocation6], %s166
        %s168 = sand.u32 %s56, 1
        %s169 = smul.addr %s168, 8
        %s170 = scalar_lea.vmem [#allocation5], %s169
        // Predicated region
        $region33: #{tpu_custom_call.1} parent=27 // pred_check
          %p171 = pneg %p69
        $region34: #{tpu_custom_call.1} parent=27 // pred_check_branch
          %173 = sbr.rel (%p171) target = $region36
        $region35: #{tpu_custom_call.1} parent=27 // pred_region
          %174 = dma.done %s167, 128
        $region36: #{tpu_custom_call.1} parent=27 // pred_fallthru
          _
        %s175 = sand.u32 %s30, 1
        %s176 = scalar_lea.sflag [#allocation3], %s175
        %s177 = sand.u32 %s30, 1
        %s178 = smul.addr %s177, 8
        %s179 = scalar_lea.vmem [#allocation2], %s178
        %p180 = pneg %p43
        %p181 = pneg %p40
        %s182 = sand.u32 %s56, 1
        %s183 = scalar_lea.sflag [#allocation6], %s182
        %s184 = sand.u32 %s56, 1
        %s185 = smul.addr %s184, 8
        %s186 = scalar_lea.vmem [#allocation5], %s185
        %p187 = pneg %p69
        %p188 = pneg %p66
        %p189 = pneg %p95
        %p190 = pneg %p92
        %s191 = sand.u32 %s82, 1
        %s192 = scalar_lea.sflag [#allocation4], %s191
        %s193 = sand.u32 %s82, 1
        %s194 = smul.addr %s193, 8
        %s195 = scalar_lea.vmem [#allocation7], %s194
        %v196 = vld [vmem:[%s161] sm:$0xff]
        %v197 = vld [vmem:[%s170] sm:$0xff]
        %v198 = vmax.f32 %v196, 0.0
        %v199 = vmul.f32 %v196, %v197
        %v200 = vsub.f32 %v198, %v199
        %v201 = vand.u32 2147483647, %v196
        %v202 = vsub.f32 0.0, %v201
        %v203 = vmul.f32 %v202, 1.442695
        %v204 = vpow.pop %v203
        %v205 = vadd.f32 %v204, 1.0
        %v206 = vlog2.pop %v205
        %v207 = vmul.f32 %v206, 0.6931472
        %v208 = vmul.f32 -0.5, %v204
        %v209 = vadd.f32 %v208, 1.0
        %v210 = vmul.f32 %v209, %v204
        %v211 = vand.u32 2147483647, %v204
        %vm212 = vcmp.lt.f32.partialorder %v211, 0.0004427343
        %v213 = vsel %vm212, %v210, %v207
        %v214 = vadd.f32 %v200, %v213
        %v215 = vadd.f32 %v214, 0.0
        %216 = vst [vmem:[%s195] sm:$0xff] %v215
        %s217 = sand.u32 %s82, 1
        %s218 = scalar_lea.sflag [#allocation4], %s217
        %s219 = sand.u32 %s82, 1
        %s220 = smul.addr %s219, 8
        %s221 = scalar_lea.vmem [#allocation7], %s220
        // Predicated region
        $region37: #{tpu_custom_call.1} parent=27 // pred_check
          %p222 = pneg %p92
        $region38: #{tpu_custom_call.1} parent=27 // pred_check_branch
          %224 = sbr.rel (%p222) target = $region40
        $region39: #{tpu_custom_call.1} parent=27 // pred_region
          %s226 = ssub.s32 128, 128
          %227 = vsyncadd %s218, %s226
          %s228 = smul.addr %s22, 128
          %s229 = scalar_lea.hbm %s2, %s228
          %s231 = sshll.u32 %s221, 4
          %s232 = int_to_ptr.vmem [resolvable:$true] %s231
          %234 = dma.vmem_to_hbm [thread:$0]  %s232, 128, %s229, %s218
        $region40: #{tpu_custom_call.1} parent=27 // pred_fallthru
          _
      $region28: #{tpu_custom_call.1} parent=5 // pred_fallthru
        _
      %p235 = scmp.le.s32.totalorder 2, %s17
      // Predicated region
      $region41: #{tpu_custom_call.1} parent=5 // pred_check
        %p236 = pneg %p235
      $region42: #{tpu_custom_call.1} parent=5 // pred_check_branch
        %238 = sbr.rel (%p236) target = $region44
      $region43: #{tpu_custom_call.1} parent=5 // pred_region
        %s239 = ssub.s32 %s17, 2
        // Predicated region
        $region45: #{tpu_custom_call.1} parent=43 // pred_check
          %p240 = pneg %p98
        $region46: #{tpu_custom_call.1} parent=43 // pred_check_branch
          %242 = sbr.rel (%p240) target = $region48
        $region47: #{tpu_custom_call.1} parent=43 // pred_region
          %s243 = sand.u32 %s83, 1
          %s244 = scalar_lea.sflag [#allocation4], %s243
          %s245 = sand.u32 %s83, 1
          %s246 = smul.addr %s245, 8
          %s247 = scalar_lea.vmem [#allocation7], %s246
          %248 = dma.done %s244, 128
        $region48: #{tpu_custom_call.1} parent=43 // pred_fallthru
          _
      $region44: #{tpu_custom_call.1} parent=5 // pred_fallthru
        _
    $region6: #{tpu_custom_call.1} parent=1 // loop_footer
      %s21 = sadd.s32 1, %s17
    $region7: #{tpu_custom_call.1} parent=1 // loop_footer_branch
      %16 = sbr.rel target = $region3
    $region8: #{tpu_custom_call.1} parent=1 // loop_exit
      _
    %249 = vsyncpa [#allocation3], 1
    %s250 = scalar_lea.sflag [#allocation3], 1
    %251 = vsyncpa %s250, 1
    %252 = vsyncpa [#allocation6], 1
    %s253 = scalar_lea.sflag [#allocation6], 1
    %254 = vsyncpa %s253, 1
    %255 = vsyncpa [#allocation4], 1
    %s256 = scalar_lea.sflag [#allocation4], 1
    %257 = vsyncpa %s256, 1

</llo_original>
